<compile_context>
chip_gen: v6e
topology: v6e:2x2x1
jax: 0.10.0
libtpu: 0.0.40
codegen_flags: <defaults>
</compile_context>

<pallas_src>
import jax
import jax.numpy as jnp
from jax.experimental import pallas as pl
from jax.experimental.pallas import tpu as pltpu


def _round_up(x, m):
    return (x + m - 1) // m * m


def _nodes_to_globals_sum_kernel(lower_ref, upper_ref, nodes_ref, out_ref, acc_ref):
    """One grid step: accumulate the segment-sum contribution of one node tile.

    lower_ref : [G, 1]        int32  first global node index of each graph
    upper_ref : [G, 1]        int32  one-past-last global node index of each graph
    nodes_ref : [tn, td]      node features for this (node-tile, feature-tile)
    out_ref   : [G, td]       final per-graph aggregates (written on last step)
    acc_ref   : [G, td] f32   resident accumulator scratch
    """
    k = pl.program_id(1)                     # node-tile (reduction) axis — last in grid

    @pl.when(k == 0)
    def _():
        acc_ref[...] = jnp.zeros_like(acc_ref)

    g = acc_ref.shape[0]
    tn = nodes_ref.shape[0]

    # Global node index of every column in this tile, per graph row.
    node_idx = k * tn + jax.lax.broadcasted_iota(jnp.int32, (g, tn), 1)
    # One-hot membership mask: row g selects its contiguous node range.
    # Compare in int32 (v5e-safe), cast only the final mask to the matmul dtype.
    one_hot = ((node_idx >= lower_ref[...]) & (node_idx < upper_ref[...]))
    one_hot = one_hot.astype(nodes_ref.dtype)

    acc_ref[...] += jnp.dot(one_hot, nodes_ref[...],
                            preferred_element_type=jnp.float32)

    @pl.when(k == pl.num_programs(1) - 1)
    def _():
        out_ref[...] = acc_ref[...].astype(out_ref.dtype)


def nodes_to_globals_aggregate(nodes, n_node, *, tile_n=1024, tile_d=512):
    """Pallas equivalent of NodesToGlobalsAggregator(reducer=segment_sum)(graph).

    nodes : [N, D] node features (graph.nodes), f32 or bf16
    n_node: [G]    int   number of nodes per graph (graph.n_node)
    returns [G, D] per-graph aggregated features (same dtype as nodes).
    """
    n, d = nodes.shape
    num_graphs = n_node.shape[0]
    out_dtype = nodes.dtype

    # Per-graph contiguous node-index ranges (sorted segment ids from
    # repeat_interleave): graph g owns global node indices [cum[g], cum[g+1]).
    cum = jnp.concatenate(
        [jnp.zeros((1,), jnp.int32), jnp.cumsum(n_node.astype(jnp.int32))])
    lower = cum[:-1].reshape(num_graphs, 1)
    upper = cum[1:].reshape(num_graphs, 1)

    # Feature-dim tiling ("parallel" axis; uses both TCs on v7x when D is large).
    if d % tile_d != 0:
        tile_d = d

    # Node-dim tiling ("arbitrary" reduction axis): big tiles to hide per-step
    # overhead; pad N up to a tile multiple (padded rows are masked out exactly).
    tile_n = min(tile_n, _round_up(n, 128))
    n_pad = _round_up(n, tile_n)
    if n_pad != n:
        nodes = jnp.pad(nodes, ((0, n_pad - n), (0, 0)))

    grid = (d // tile_d, n_pad // tile_n)

    return pl.pallas_call(
        _nodes_to_globals_sum_kernel,
        out_shape=jax.ShapeDtypeStruct((num_graphs, d), out_dtype),
        grid_spec=pltpu.PrefetchScalarGridSpec(
            num_scalar_prefetch=0,
            grid=grid,
            in_specs=[
                pl.BlockSpec((num_graphs, 1), lambda j, k: (0, 0)),        # lower bounds
                pl.BlockSpec((num_graphs, 1), lambda j, k: (0, 0)),        # upper bounds
                pl.BlockSpec((tile_n, tile_d), lambda j, k: (k, j)),       # node tile
            ],
            out_specs=pl.BlockSpec((num_graphs, tile_d), lambda j, k: (0, j)),
            scratch_shapes=[pltpu.VMEM((num_graphs, tile_d), jnp.float32)],
        ),
        compiler_params=pltpu.CompilerParams(
            dimension_semantics=("parallel", "arbitrary")),
    )(lower, upper, nodes)


if __name__ == "__main__":
    key = jax.random.PRNGKey(0)

    # Small synthetic "graph": 8 graphs, 256 total nodes, 128-dim node features.
    num_graphs = 8
    n_node = jnp.array([40, 24, 36, 28, 44, 20, 32, 32], dtype=jnp.int32)  # sums to 256
    total_nodes = 256
    feat_dim = 128

    nodes = jax.random.normal(key, (total_nodes, feat_dim), dtype=jnp.float32)

    out = nodes_to_globals_aggregate(nodes, n_node)
    out = jax.block_until_ready(out)

    # Reference check (plain JAX segment_sum over repeat_interleave'd indices).
    graph_index = jnp.arange(num_graphs, dtype=jnp.int32)
    indices = jnp.repeat(graph_index, n_node, total_repeat_length=total_nodes)
    ref = jax.ops.segment_sum(nodes, indices, num_segments=num_graphs)
    assert out.shape == (num_graphs, feat_dim)
    assert jnp.allclose(out, ref, atol=1e-4, rtol=1e-4), "mismatch vs reference"

    # TODO(synk): only the segment_sum reducer is implemented; min/max/prod/mean
    # reducers from the original module's docstring would need separate kernels.

    print("KERNEL_OK")
</pallas_src>

<mosaic_0001>
module attributes {stable_mosaic.version = 11 : i64} {
  func.func @_nodes_to_globals_sum_kernel(%arg0: i32, %arg1: i32, %arg2: memref<8x1xi32, #tpu.memory_space<vmem>>, %arg3: memref<8x1xi32, #tpu.memory_space<vmem>>, %arg4: memref<256x128xf32, #tpu.memory_space<vmem>>, %arg5: memref<8x128xf32, #tpu.memory_space<vmem>>, %arg6: memref<8x128xf32, #tpu.memory_space<vmem>>) attributes {dimension_semantics = [#tpu.dimension_semantics<parallel>, #tpu.dimension_semantics<arbitrary>], iteration_bounds = array<i64: 1, 1>, scalar_prefetch = 0 : i64, scratch_operands = 1 : i64, tpu.core_type = #tpu.core_type<tc>, window_params = [{pipeline_mode = #tpu.pipeline_mode<synchronous>, transform_indices = @transform_0, window_bounds = array<i64: 8, 1>}, {pipeline_mode = #tpu.pipeline_mode<synchronous>, transform_indices = @transform_1, window_bounds = array<i64: 8, 1>}, {transform_indices = @transform_2, window_bounds = array<i64: 256, 128>}, {transform_indices = @transform_3, window_bounds = array<i64: 8, 128>}]} {
    %c0_i32 = arith.constant 0 : i32
    %0 = arith.cmpi eq, %arg1, %c0_i32 : i32
    %1 = arith.extui %0 : i1 to i32
    %c0_i32_0 = arith.constant 0 : i32
    %2 = arith.cmpi ne, %1, %c0_i32_0 : i32
    scf.if %2 {
      %cst_12 = arith.constant 0.000000e+00 : f32
      %24 = vector.broadcast %cst_12 : f32 to vector<8x128xf32>
      %c0_13 = arith.constant 0 : index
      %c0_14 = arith.constant 0 : index
      %25 = vector.load %arg6[%c0_13, %c0_14] : memref<8x128xf32, #tpu.memory_space<vmem>>, vector<8x128xf32>
      tpu.vector_store %arg6[%c0_13, %c0_14], %24 {strides = array<i32>} : memref<8x128xf32, #tpu.memory_space<vmem>>, vector<8x128xf32>,
    } else {
    }
    %c256_i32 = arith.constant 256 : i32
    %3 = arith.muli %arg1, %c256_i32 : i32
    %4 = tpu.iota {dimensions = array<i32: 1>} : vector<8x256xi32>
    %5 = vector.broadcast %3 : i32 to vector<8x256xi32>
    %6 = arith.addi %5, %4 : vector<8x256xi32>
    %c0 = arith.constant 0 : index
    %c0_1 = arith.constant 0 : index
    %7 = vector.load %arg2[%c0, %c0_1] : memref<8x1xi32, #tpu.memory_space<vmem>>, vector<8x1xi32>
    %8 = vector.broadcast %7 : vector<8x1xi32> to vector<8x256xi32>
    %9 = arith.cmpi sge, %6, %8 : vector<8x256xi32>
    %c0_2 = arith.constant 0 : index
    %c0_3 = arith.constant 0 : index
    %10 = vector.load %arg3[%c0_2, %c0_3] : memref<8x1xi32, #tpu.memory_space<vmem>>, vector<8x1xi32>
    %11 = vector.broadcast %10 : vector<8x1xi32> to vector<8x256xi32>
    %12 = arith.cmpi slt, %6, %11 : vector<8x256xi32>
    %13 = arith.andi %9, %12 : vector<8x256xi1>
    %14 = arith.extui %13 : vector<8x256xi1> to vector<8x256xi32>
    %15 = arith.sitofp %14 : vector<8x256xi32> to vector<8x256xf32>
    %c0_4 = arith.constant 0 : index
    %c0_5 = arith.constant 0 : index
    %16 = vector.load %arg6[%c0_4, %c0_5] : memref<8x128xf32, #tpu.memory_space<vmem>>, vector<8x128xf32>
    %c0_6 = arith.constant 0 : index
    %c0_7 = arith.constant 0 : index
    %17 = vector.load %arg4[%c0_6, %c0_7] : memref<256x128xf32, #tpu.memory_space<vmem>>, vector<256x128xf32>
    %cst = arith.constant dense<0.000000e+00> : vector<8x128xf32>
    %18 = tpu.matmul %15, %17, %cst {dimension_numbers = #tpu.dot_dimension_numbers<[1], [0], [0], [1], [0, 0, 1, 1], [], []>} : vector<8x256xf32>, vector<256x128xf32>, vector<8x128xf32> -> vector<8x128xf32>
    %19 = arith.addf %16, %18 : vector<8x128xf32>
    %c0_8 = arith.constant 0 : index
    %c0_9 = arith.constant 0 : index
    %20 = vector.load %arg6[%c0_8, %c0_9] : memref<8x128xf32, #tpu.memory_space<vmem>>, vector<8x128xf32>
    tpu.vector_store %arg6[%c0_8, %c0_9], %19 {strides = array<i32>} : memref<8x128xf32, #tpu.memory_space<vmem>>, vector<8x128xf32>,
    %c0_i32_10 = arith.constant 0 : i32
    %21 = arith.cmpi eq, %arg1, %c0_i32_10 : i32
    %22 = arith.extui %21 : i1 to i32
    %c0_i32_11 = arith.constant 0 : i32
    %23 = arith.cmpi ne, %22, %c0_i32_11 : i32
    scf.if %23 {
      %c0_12 = arith.constant 0 : index
      %c0_13 = arith.constant 0 : index
      %24 = vector.load %arg6[%c0_12, %c0_13] : memref<8x128xf32, #tpu.memory_space<vmem>>, vector<8x128xf32>
      %c0_14 = arith.constant 0 : index
      %c0_15 = arith.constant 0 : index
      %25 = vector.load %arg5[%c0_14, %c0_15] : memref<8x128xf32, #tpu.memory_space<vmem>>, vector<8x128xf32>
      tpu.vector_store %arg5[%c0_14, %c0_15], %24 {strides = array<i32>} : memref<8x128xf32, #tpu.memory_space<vmem>>, vector<8x128xf32>,
    } else {
    }
    return
  }
  func.func @transform_0(%arg0: i32, %arg1: i32) -> (i32, i32) {
    %c0_i32 = arith.constant 0 : i32
    %c0_i32_0 = arith.constant 0 : i32
    %c0_i32_1 = arith.constant 0 : i32
    return %c0_i32, %c0_i32_0 : i32, i32
  }
  func.func @transform_1(%arg0: i32, %arg1: i32) -> (i32, i32) {
    %c0_i32 = arith.constant 0 : i32
    %c0_i32_0 = arith.constant 0 : i32
    %c0_i32_1 = arith.constant 0 : i32
    return %c0_i32, %c0_i32_0 : i32, i32
  }
  func.func @transform_2(%arg0: i32, %arg1: i32) -> (i32, i32) {
    %c0_i32 = arith.constant 0 : i32
    return %arg1, %arg0 : i32, i32
  }
  func.func @transform_3(%arg0: i32, %arg1: i32) -> (i32, i32) {
    %c0_i32 = arith.constant 0 : i32
    %c0_i32_0 = arith.constant 0 : i32
    return %c0_i32, %arg0 : i32, i32
  }
}

</mosaic_0001>

<llo_original>
// kernel: tpu_custom_call.1
$region0: #{tpu_custom_call.1}
  #allocation0 [shape = 'u32[]', space=smem, size = 0x4, offset = 0x4, fixed_abs, tag = 'smem constant byte address 0x4 - core index']
  #allocation1 [shape = 'u32[144,128]{1,0:T(1,128)}', space=vmem, size = 0x12000, scoped, tag = 'internal scratch']
  #allocation2 [shape = 'f32[8,128]{1,0:T(8,128)}', space=vmem, size = 0x1000, scoped, tag = 'scratch operand']
  %s0 = inlined_call_operand.vmem [shape: s32[8,1], index: 0, kind: input, shape index: {}]
  %s1 = inlined_call_operand.vmem [shape: s32[8,1], index: 1, kind: input, shape index: {}]
  %s2 = inlined_call_operand.hbm [shape: f32[256,128], index: 2, kind: input, shape index: {}]
  %s3 = inlined_call_operand.hbm [shape: f32[8,128], index: 3, kind: output, shape index: {}]
  %s4 = sld [smem:[#allocation0]]
  $region34: #{tpu_custom_call.1} parent=0
    _
  %s6 = ssub.s32 1, %s4
  %s7 = scalar_select 0, %s6, %s4
  $region1: #{tpu_custom_call.1} parent=0
    #allocation3 [shape = 'u8[131072]{0}', space=vmem, size = 0x20000, scoped, tag = 'input window, operand 2, single buffered']
    #allocation4 [shape = 's32[1]{0}', space=sflag, size = 0x4, scoped, tag = 'scoped memory for tpu_custom_call.1']
    #allocation5 [shape = 's32[1]{0}', space=sflag, size = 0x4, scoped, tag = 'scoped memory for tpu_custom_call.1']
    #allocation6 [shape = 'u8[4096]{0}', space=vmem, size = 0x1000, scoped, tag = 'output window, operand 0, single buffered']
    %8 = vsyncpa [#allocation4], 0
    %9 = vsyncpa [#allocation5], 0
    // Predicated region
    $region2: #{tpu_custom_call.1} parent=1 // pred_check
      _
    $region3: #{tpu_custom_call.1} parent=1 // pred_check_branch
      %11 = sbr.rel (0) target = $region5
    $region4: #{tpu_custom_call.1} parent=1 // pred_region
      _
    $region5: #{tpu_custom_call.1} parent=1 // pred_fallthru
      _
    // Predicated region
    $region6: #{tpu_custom_call.1} parent=1 // pred_check
      _
    $region7: #{tpu_custom_call.1} parent=1 // pred_check_branch
      %13 = sbr.rel (0) target = $region9
    $region8: #{tpu_custom_call.1} parent=1 // pred_region
      _
    $region9: #{tpu_custom_call.1} parent=1 // pred_fallthru
      _
    // Predicated region
    $region10: #{tpu_custom_call.1} parent=1 // pred_check
      _
    $region11: #{tpu_custom_call.1} parent=1 // pred_check_branch
      %15 = sbr.rel (0) target = $region13
    $region12: #{tpu_custom_call.1} parent=1 // pred_region
      %s17 = ssub.s32 4096, 4096
      %18 = vsyncadd [#allocation4], %s17
      %s19 = sshll.u32 [#allocation3], 4
      %s20 = int_to_ptr.vmem [resolvable:$true] %s19
      %25 = dma.hbm_to_vmem [thread:$0]  %s2, 4096, %s20, [#allocation4], 128, 128, 8
    $region13: #{tpu_custom_call.1} parent=1 // pred_fallthru
      _
    // Predicated region
    $region14: #{tpu_custom_call.1} parent=1 // pred_check
      _
    $region15: #{tpu_custom_call.1} parent=1 // pred_check_branch
      %27 = sbr.rel (0) target = $region17
    $region16: #{tpu_custom_call.1} parent=1 // pred_region
      %28 = dma.done [#allocation4], 4096
    $region17: #{tpu_custom_call.1} parent=1 // pred_fallthru
      _
    %p29 = scmp.eq.s32.totalorder 0, 0
    // Predicated region
    $region18: #{tpu_custom_call.1} parent=1 // pred_check
      %p30 = pneg %p29
    $region19: #{tpu_custom_call.1} parent=1 // pred_check_branch
      %32 = sbr.rel (%p30) target = $region21
    $region20: #{tpu_custom_call.1} parent=1 // pred_region
      %33 = vst [vmem:[#allocation2] sm:$0xff] 0.0
    $region21: #{tpu_custom_call.1} parent=1 // pred_fallthru
      _
    %s34 = smul.u32 0, 256
    %v35 = vlaneseq
    %v36 = vand.u32 %v35, 127
    %v37 = vadd.s32 %v36, 128
    %v38 = vstv %s34
    %v39 = vadd.s32 %v38, %v36
    %v40 = vadd.s32 %v38, %v37
    %v41 = vld [vmem:[%s0] sm:$0xff]
    %42 = vset.pattern.permute.xlu0 0
    %43 = vperm.xlu0 %42, %v41
    %v44 = vpop.permute.xlu0 %43
    %vm45 = vcmp.ge.s32.totalorder %v39, %v44
    %vm46 = vcmp.ge.s32.totalorder %v40, %v44
    %v47 = vld [vmem:[%s1] sm:$0xff]
    %48 = vset.pattern.permute.xlu0 0
    %49 = vperm.xlu0 %48, %v47
    %v50 = vpop.permute.xlu0 %49
    %vm51 = vcmp.lt.s32.totalorder %v39, %v50
    %vm52 = vcmp.lt.s32.totalorder %v40, %v50
    %vm53 = vmand %vm45, %vm51
    %vm54 = vmand %vm46, %vm52
    %v55 = vsel %vm53, 1, 0
    %v56 = vsel %vm54, 1, 0
    %v57 = vcvt.s32.f32 %v55
    %v58 = vcvt.s32.f32 %v56
    %v59 = vld [vmem:[#allocation2] sm:$0xff]
    %v60 = vld [vmem:[#allocation3] sm:$0xff]
    %v61 = vld [vmem:[#allocation3 + $0x8] sm:$0xff]
    %v62 = vld [vmem:[#allocation3 + $0x10] sm:$0xff]
    %v63 = vld [vmem:[#allocation3 + $0x18] sm:$0xff]
    %v64 = vld [vmem:[#allocation3 + $0x20] sm:$0xff]
    %v65 = vld [vmem:[#allocation3 + $0x28] sm:$0xff]
    %v66 = vld [vmem:[#allocation3 + $0x30] sm:$0xff]
    %v67 = vld [vmem:[#allocation3 + $0x38] sm:$0xff]
    %v68 = vld [vmem:[#allocation3 + $0x40] sm:$0xff]
    %v69 = vld [vmem:[#allocation3 + $0x48] sm:$0xff]
    %v70 = vld [vmem:[#allocation3 + $0x50] sm:$0xff]
    %v71 = vld [vmem:[#allocation3 + $0x58] sm:$0xff]
    %v72 = vld [vmem:[#allocation3 + $0x60] sm:$0xff]
    %v73 = vld [vmem:[#allocation3 + $0x68] sm:$0xff]
    %v74 = vld [vmem:[#allocation3 + $0x70] sm:$0xff]
    %v75 = vld [vmem:[#allocation3 + $0x78] sm:$0xff]
    %v76 = vld [vmem:[#allocation3 + $0x80] sm:$0xff]
    %v77 = vld [vmem:[#allocation3 + $0x88] sm:$0xff]
    %v78 = vld [vmem:[#allocation3 + $0x90] sm:$0xff]
    %v79 = vld [vmem:[#allocation3 + $0x98] sm:$0xff]
    %v80 = vld [vmem:[#allocation3 + $0xa0] sm:$0xff]
    %v81 = vld [vmem:[#allocation3 + $0xa8] sm:$0xff]
    %v82 = vld [vmem:[#allocation3 + $0xb0] sm:$0xff]
    %v83 = vld [vmem:[#allocation3 + $0xb8] sm:$0xff]
    %v84 = vld [vmem:[#allocation3 + $0xc0] sm:$0xff]
    %v85 = vld [vmem:[#allocation3 + $0xc8] sm:$0xff]
    %v86 = vld [vmem:[#allocation3 + $0xd0] sm:$0xff]
    %v87 = vld [vmem:[#allocation3 + $0xd8] sm:$0xff]
    %v88 = vld [vmem:[#allocation3 + $0xe0] sm:$0xff]
    %v89 = vld [vmem:[#allocation3 + $0xe8] sm:$0xff]
    %v90 = vld [vmem:[#allocation3 + $0xf0] sm:$0xff]
    %v91 = vld [vmem:[#allocation3 + $0xf8] sm:$0xff]
    %92 = vmatprep.subr.mxu0 0.0
    %93 = vmatpush1.msra.mxu0 %v75
    %94 = vmatprep.subr.mxu0 0.0
    %95 = vmatpush1.msra.mxu0 %v74
    %96 = vmatprep.subr.mxu0 0.0
    %97 = vmatpush1.msra.mxu0 %v73
    %98 = vmatprep.subr.mxu0 0.0
    %99 = vmatpush1.msra.mxu0 %v72
    %100 = vmatprep.subr.mxu0 0.0
    %101 = vmatpush1.msra.mxu0 %v71
    %102 = vmatprep.subr.mxu0 0.0
    %103 = vmatpush1.msra.mxu0 %v70
    %104 = vmatprep.subr.mxu0 0.0
    %105 = vmatpush1.msra.mxu0 %v69
    %106 = vmatprep.subr.mxu0 0.0
    %107 = vmatpush1.msra.mxu0 %v68
    %108 = vmatprep.subr.mxu0 0.0
    %109 = vmatpush1.msra.mxu0 %v67
    %110 = vmatprep.subr.mxu0 0.0
    %111 = vmatpush1.msra.mxu0 %v66
    %112 = vmatprep.subr.mxu0 0.0
    %113 = vmatpush1.msra.mxu0 %v65
    %114 = vmatprep.subr.mxu0 0.0
    %115 = vmatpush1.msra.mxu0 %v64
    %116 = vmatprep.subr.mxu0 0.0
    %117 = vmatpush1.msra.mxu0 %v63
    %118 = vmatprep.subr.mxu0 0.0
    %119 = vmatpush1.msra.mxu0 %v62
    %120 = vmatprep.subr.mxu0 0.0
    %121 = vmatpush1.msra.mxu0 %v61
    %122 = vmatprep.subr.mxu0 0.0
    %123 = vmatpush1.msra.mxu0 %v60
    %124 = vmatprep.subr.mxu0 0.0
    %125 = vmatpush2.msra.mxu0 %v91
    %126 = vmatprep.subr.mxu0 0.0
    %127 = vmatpush2.msra.mxu0 %v90
    %128 = vmatprep.subr.mxu0 0.0
    %129 = vmatpush2.msra.mxu0 %v89
    %130 = vmatprep.subr.mxu0 0.0
    %131 = vmatpush2.msra.mxu0 %v88
    %132 = vmatprep.subr.mxu0 0.0
    %133 = vmatpush2.msra.mxu0 %v87
    %134 = vmatprep.subr.mxu0 0.0
    %135 = vmatpush2.msra.mxu0 %v86
    %136 = vmatprep.subr.mxu0 0.0
    %137 = vmatpush2.msra.mxu0 %v85
    %138 = vmatprep.subr.mxu0 0.0
    %139 = vmatpush2.msra.mxu0 %v84
    %140 = vmatprep.subr.mxu0 0.0
    %141 = vmatpush2.msra.mxu0 %v83
    %142 = vmatprep.subr.mxu0 0.0
    %143 = vmatpush2.msra.mxu0 %v82
    %144 = vmatprep.subr.mxu0 0.0
    %145 = vmatpush2.msra.mxu0 %v81
    %146 = vmatprep.subr.mxu0 0.0
    %147 = vmatpush2.msra.mxu0 %v80
    %148 = vmatprep.subr.mxu0 0.0
    %149 = vmatpush2.msra.mxu0 %v79
    %150 = vmatprep.subr.mxu0 0.0
    %151 = vmatpush2.msra.mxu0 %v78
    %152 = vmatprep.subr.mxu0 0.0
    %153 = vmatpush2.msra.mxu0 %v77
    %154 = vmatprep.subr.mxu0 0.0
    %155 = vmatpush2.msra.mxu0 %v76
    %156 = vmatprep.mubr.f32.mxu0 %v58
    %157 = vmatmul.mubr.f32.gmra.mxu0 %v57
    %v158 = vpop.f32.mrf.mxu0
    %v159 = vadd.f32 0.0, %v158
    %v160 = vpop.f32.mrf.mxu0
    %161 = vdwg.mxu0
    %v162 = vadd.f32 %v59, %v159
    %163 = vst [vmem:[#allocation2] sm:$0xff] %v162
    // Predicated region
    $region22: #{tpu_custom_call.1} parent=1 // pred_check
      %p164 = pneg %p29
    $region23: #{tpu_custom_call.1} parent=1 // pred_check_branch
      %166 = sbr.rel (%p164) target = $region25
    $region24: #{tpu_custom_call.1} parent=1 // pred_region
      %v167 = vld [vmem:[#allocation2] sm:$0xff]
      %168 = vst [vmem:[#allocation6] sm:$0xff] %v167
    $region25: #{tpu_custom_call.1} parent=1 // pred_fallthru
      _
    // Predicated region
    $region26: #{tpu_custom_call.1} parent=1 // pred_check
      _
    $region27: #{tpu_custom_call.1} parent=1 // pred_check_branch
      %170 = sbr.rel (0) target = $region29
    $region28: #{tpu_custom_call.1} parent=1 // pred_region
      %s172 = ssub.s32 128, 128
      %173 = vsyncadd [#allocation5], %s172
      %s175 = sshll.u32 [#allocation6], 4
      %s176 = int_to_ptr.vmem [resolvable:$true] %s175
      %178 = dma.vmem_to_hbm [thread:$0]  %s176, 128, %s3, [#allocation5]
    $region29: #{tpu_custom_call.1} parent=1 // pred_fallthru
      _
    // Predicated region
    $region30: #{tpu_custom_call.1} parent=1 // pred_check
      _
    $region31: #{tpu_custom_call.1} parent=1 // pred_check_branch
      %180 = sbr.rel (0) target = $region33
    $region32: #{tpu_custom_call.1} parent=1 // pred_region
      %181 = dma.done [#allocation5], 128
    $region33: #{tpu_custom_call.1} parent=1 // pred_fallthru
      _
    %182 = vsyncpa [#allocation4], 1
    %183 = vsyncpa [#allocation5], 1

</llo_original>
